<compile_context>
chip_gen: v5e
topology: v5e:2x2
jax: 0.10.0
libtpu: 0.0.40
codegen_flags: <defaults>
</compile_context>

<pallas_src>
import jax
import jax.numpy as jnp
from jax.experimental import pallas as pl
from jax.experimental.pallas import tpu as pltpu

_LANES = 128
_SMALL_BYTES = 1 << 20        # <= 1 MiB -> single block
_TARGET_TILE_BYTES = 2 << 20  # ~2 MiB/buffer -> 8 MiB with double buffering
_MIN_STEPS = 4                # keep the pipeline + v7x megacore busy


def _ptmodule_kernel(x_ref, o_ref):
    # (x + 2) + 3*x - x/2  ==  3.5*x + 2
    o_ref[...] = x_ref[...] * 3.5 + 2.0


def _round_up(v, m):
    return ((v + m - 1) // m) * m


def _pallas_elementwise_2d(x2d):
    """Run the elementwise kernel over a (rows, cols) slab, cols % 128 == 0."""
    rows, cols = x2d.shape
    itemsize = jnp.dtype(x2d.dtype).itemsize
    total_bytes = rows * cols * itemsize

    if total_bytes <= _SMALL_BYTES:
        # Tiny input: one block covering the whole slab (full-extent rows, so
        # no (8,128) divisibility requirement on the row dim).
        tile_rows = rows
    else:
        max_tile_rows = max(8, (_TARGET_TILE_BYTES // (cols * itemsize)) // 8 * 8)
        # Want at least _MIN_STEPS grid steps so input-DMA of step i+1 hides
        # behind the store of step i, and both v7x TCs get work.
        tile_rows = min(max_tile_rows, max(8, (rows // _MIN_STEPS) // 8 * 8))

    grid_rows = pl.cdiv(rows, tile_rows)
    if grid_rows > 1 and grid_rows % 2 == 1:
        # Even step count -> balanced sharding across v7x's two TensorCores.
        alt = _round_up(pl.cdiv(rows, grid_rows + 1), 8)
        if 8 <= alt <= tile_rows:
            tile_rows = alt
            grid_rows = pl.cdiv(rows, tile_rows)

    return pl.pallas_call(
        _ptmodule_kernel,
        out_shape=jax.ShapeDtypeStruct((rows, cols), x2d.dtype),
        grid=(grid_rows,),
        in_specs=[pl.BlockSpec((tile_rows, cols), lambda i: (i, 0))],
        out_specs=pl.BlockSpec((tile_rows, cols), lambda i: (i, 0)),
        compiler_params=pltpu.CompilerParams(
            dimension_semantics=("parallel",),
        ),
    )(x2d)


def ptmodule_forward(x):
    """(x + 2) + 3*x - x/2, elementwise, matching PtModule.forward."""
    # PyTorch's x/2 promotes integer inputs to float; mirror that so the fold
    # to 3.5*x + 2 stays exact.
    if not jnp.issubdtype(x.dtype, jnp.floating):
        x = x.astype(jnp.float32)

    orig_shape = x.shape
    n = x.size

    n_aligned = (n // _LANES) * _LANES
    if n_aligned == 0:
        # Fewer than 128 elements: not worth a kernel launch.
        return x * 3.5 + 2.0

    # Largest lane-dense width (multiple of 128) dividing the aligned prefix.
    cols = _LANES
    for c in (1024, 512, 256):
        if n_aligned % c == 0:
            cols = c
            break

    flat = x.reshape(-1)
    if n_aligned == n:
        # Common case: pure layout reshape, no pad / no slice copies.
        out2d = _pallas_elementwise_2d(flat.reshape(n // cols, cols))
        return out2d.reshape(orig_shape)

    # Rare fallback: Pallas on the 128-aligned prefix, plain jnp on the
    # <128-element tail (avoids a full pad+slice copy of the whole tensor).
    head = _pallas_elementwise_2d(flat[:n_aligned].reshape(n_aligned // cols, cols))
    tail = flat[n_aligned:] * 3.5 + 2.0
    return jnp.concatenate([head.reshape(-1), tail]).reshape(orig_shape)


if __name__ == "__main__":
    key = jax.random.PRNGKey(0)
    x = jax.random.normal(key, (2, 4, 16, 16), dtype=jnp.float32)

    fwd = jax.jit(ptmodule_forward)
    out = jax.block_until_ready(fwd(x))

    # Reference check mirroring the PyTorch forward exactly.
    ref = (x + 2.0) + (x * 3.0) - (x / 2.0)
    assert out.shape == x.shape
    assert out.dtype == x.dtype
    assert jnp.allclose(out, ref, rtol=1e-6, atol=1e-5), "mismatch vs reference"

    print("KERNEL_OK")
</pallas_src>

<mosaic_0001>
module attributes {stable_mosaic.version = 11 : i64} {
  func.func @_ptmodule_kernel(%arg0: i32, %arg1: memref<2x1024xf32, #tpu.memory_space<vmem>>, %arg2: memref<2x1024xf32, #tpu.memory_space<vmem>>) attributes {dimension_semantics = [#tpu.dimension_semantics<parallel>], iteration_bounds = array<i64: 1>, scalar_prefetch = 0 : i64, scratch_operands = 0 : i64, tpu.core_type = #tpu.core_type<tc>, window_params = [{transform_indices = @transform_0, window_bounds = array<i64: 2, 1024>}, {transform_indices = @transform_1, window_bounds = array<i64: 2, 1024>}]} {
    %c0 = arith.constant 0 : index
    %c0_0 = arith.constant 0 : index
    %0 = vector.load %arg1[%c0, %c0_0] : memref<2x1024xf32, #tpu.memory_space<vmem>>, vector<2x1024xf32>
    %cst = arith.constant 3.500000e+00 : f32
    %1 = vector.broadcast %cst : f32 to vector<2x1024xf32>
    %2 = arith.mulf %0, %1 : vector<2x1024xf32>
    %cst_1 = arith.constant 2.000000e+00 : f32
    %3 = vector.broadcast %cst_1 : f32 to vector<2x1024xf32>
    %4 = arith.addf %2, %3 : vector<2x1024xf32>
    %c0_2 = arith.constant 0 : index
    %c0_3 = arith.constant 0 : index
    %5 = vector.load %arg2[%c0_2, %c0_3] : memref<2x1024xf32, #tpu.memory_space<vmem>>, vector<2x1024xf32>
    tpu.vector_store %arg2[%c0_2, %c0_3], %4 {strides = array<i32>} : memref<2x1024xf32, #tpu.memory_space<vmem>>, vector<2x1024xf32>,
    return
  }
  func.func @transform_0(%arg0: i32) -> (i32, i32) {
    %c0_i32 = arith.constant 0 : i32
    %c0_i32_0 = arith.constant 0 : i32
    return %arg0, %c0_i32 : i32, i32
  }
  func.func @transform_1(%arg0: i32) -> (i32, i32) {
    %c0_i32 = arith.constant 0 : i32
    %c0_i32_0 = arith.constant 0 : i32
    return %arg0, %c0_i32 : i32, i32
  }
}

</mosaic_0001>

<llo_original>
// kernel: ptmodule_forward.1
$region0: #{ptmodule_forward.1}
  #allocation0 [shape = 'u32[]', space=smem, size = 0x4, offset = 0x4, fixed_abs, tag = 'smem constant byte address 0x4 - core index']
  #allocation1 [shape = 'u32[72,128]{1,0:T(1,128)}', space=vmem, size = 0x9000, scoped, tag = 'internal scratch']
  %s0 = inlined_call_operand.vmem [shape: f32[2,1024], index: 0, kind: input, shape index: {}]
  %s1 = inlined_call_operand.vmem [shape: f32[2,1024], index: 1, kind: output, shape index: {}]
  %s2 = sld [smem:[#allocation0]]
  $region14: #{ptmodule_forward.1} parent=0
    _
  %s4 = ssub.s32 1, %s2
  %s5 = scalar_select 0, %s4, %s2
  // Predicated region
  $region2: #{ptmodule_forward.1} parent=0 // pred_check
    _
  $region3: #{ptmodule_forward.1} parent=0 // pred_check_branch
    %7 = sbr.rel (0) target = $region5
  $region4: #{ptmodule_forward.1} parent=0 // pred_region
    _
  $region5: #{ptmodule_forward.1} parent=0 // pred_fallthru
    _
  %v8 = vld [vmem:[%s0] sm:$0xff]
  %v9 = vld [vmem:[%s0 + $0x8] sm:$0xff]
  %v10 = vmul.f32 %v8, 3.5
  %v11 = vmul.f32 %v9, 3.5
  %v12 = vadd.f32 %v10, 2.0
  %v13 = vadd.f32 %v11, 2.0
  %14 = vst [vmem:[%s1] sm:$0xff] %v12
  %15 = vst [vmem:[%s1 + $0x8] sm:$0xff] %v13
  // Predicated region
  $region6: #{ptmodule_forward.1} parent=0 // pred_check
    _
  $region7: #{ptmodule_forward.1} parent=0 // pred_check_branch
    %17 = sbr.rel (0) target = $region9
  $region8: #{ptmodule_forward.1} parent=0 // pred_region
    _
  $region9: #{ptmodule_forward.1} parent=0 // pred_fallthru
    _
  // Predicated region
  $region10: #{ptmodule_forward.1} parent=0 // pred_check
    _
  $region11: #{ptmodule_forward.1} parent=0 // pred_check_branch
    %19 = sbr.rel (0) target = $region13
  $region12: #{ptmodule_forward.1} parent=0 // pred_region
    _
  $region13: #{ptmodule_forward.1} parent=0 // pred_fallthru
    _

</llo_original>
